<compile_context>
chip_gen: v7x
topology: tpu7x:2x2x1
jax: 0.10.0
libtpu: 0.0.40
codegen_flags: <defaults>
</compile_context>

<pallas_src>
import math

import jax
import jax.numpy as jnp
from jax import lax
from jax.experimental import pallas as pl
from jax.experimental.pallas import tpu as pltpu  # noqa: F401  (TPU backend)

# ----------------------------- configuration --------------------------------
B = 2                         # batch
S = 8                         # opt.max_sequence_length
V = 50                        # vocab size of opt.lookup_table
D = 32                        # embedding_dim
M = 8                         # opt.measurement_size
U = 2 * M                     # measurement units (2 * num_measurements)
NGRAM_VALUES = (2, 3)         # opt.ngram_value = "2,3"
G = len(NGRAM_VALUES)
POOLING = ("max", "average")  # opt.pooling_type = "max,average"
H = 32                        # opt.hidden_units
FEATURE_NUM = sum(U for _ in POOLING)   # 2*num_measurements per pooling type
DENSE1_IN = G * FEATURE_NUM             # len(ngram) * feature_num == 2*U*G
OUT_PAD = 128                 # lane-dense padded logits width


# --------------------------- fused Pallas kernel ------------------------------
# mixture + measurement for every (b, s) window of both n-gram branches,
# softmax of mixture weights, max/average pooling over the sequence, and the
# two dense layers -- all in a single VMEM-resident step.
def _local_mixture_kernel(r_ref, i_ref, w_ref, meas_ref, w1s_ref, b1_ref,
                          w2_ref, b2_ref, out_ref):
    r = r_ref[...]            # [B, S, D] real sequence embedding
    im = i_ref[...]           # [B, S, D] imag sequence embedding
    wts = w_ref[...]          # [B, S]    raw mixture weights (L2 norms)
    meas = meas_ref[...]      # [D, 2U]   (mr.T | mi.T)

    bsz, seq, dim = r.shape
    u = meas.shape[1] // 2

    # --- per-position measurement prob Tr(|v_t><v_t| P_u):  two matmuls ------
    rf = r.reshape(bsz * seq, dim)
    imf = im.reshape(bsz * seq, dim)
    rm = jnp.dot(rf, meas, preferred_element_type=jnp.float32)    # [B*S, 2U]
    imm = jnp.dot(imf, meas, preferred_element_type=jnp.float32)  # [B*S, 2U]
    rr, ri = rm[:, :u], rm[:, u:]
    ir, ii = imm[:, :u], imm[:, u:]
    tmeas = ((rr - ii) ** 2 + (ri + ir) ** 2).reshape(bsz, seq, u)  # [B, S, U]

    # --- mixture-weight softmax over the sequence axis (in-kernel) -----------
    e = jnp.exp(wts)                                    # [B, S]   (EUP)
    tot = jnp.sum(e, axis=1, keepdims=True)             # [B, 1]

    rs = lax.broadcasted_iota(jnp.int32, (seq, seq), 0)  # window start s
    cs = lax.broadcasted_iota(jnp.int32, (seq, seq), 1)  # token position t
    diff = cs - rs                                       # window offset k = t - s

    # band_k[b, s, t] = softmaxed weight of the token at offset k of window s
    n_max = max(NGRAM_VALUES)
    bands = []
    zk = tot
    for k in range(n_max):
        if k > 0:
            # denominator for offset k: drop token k-1, add one zero-padded
            # slot (exp(0) = 1) -- identical to softmax over end-padded windows
            zk = zk - e[:, k - 1:k] + 1.0
        band = (diff == k).astype(jnp.float32)[None]     # [1, S, S]
        coef = (e * (1.0 / zk))[:, None, :]              # [B, 1, S]
        bands.append(band * coef)                        # [B, S, S]

    # --- per-gram probabilities + pooling + dense head ------------------------
    h = b1_ref[...]                                      # [1, H]
    for gi, n in enumerate(NGRAM_VALUES):
        a_n = bands[0]
        for k in range(1, n):
            a_n = a_n + bands[k]
        probs_n = jnp.einsum("bst,btu->bsu", a_n, tmeas,
                             preferred_element_type=jnp.float32)  # [B, S, U]
        p_max = jnp.max(probs_n, axis=1)                 # 'max'     -> [B, U]
        p_avg = jnp.mean(probs_n, axis=1)                # 'average' -> [B, U]
        h = h + jnp.dot(p_max, w1s_ref[0 * G + gi],
                        preferred_element_type=jnp.float32)
        h = h + jnp.dot(p_avg, w1s_ref[1 * G + gi],
                        preferred_element_type=jnp.float32)
    h = jnp.maximum(h, 0.0)                              # ReLU
    out_ref[...] = (jnp.dot(h, w2_ref[...],
                            preferred_element_type=jnp.float32) + b2_ref[...])


def _slice_dense1_weight(w1):
    """Re-slice dense_1 weights [(p*U + u)*G + g, H] into per-(pooling, gram)
    blocks so the kernel needs no feature concatenation (layout plumbing)."""
    blocks = []
    for p in range(len(POOLING)):        # 0 = max, 1 = average
        for g in range(G):
            rows = (p * U + jnp.arange(U)) * G + g
            blocks.append(w1[rows])
    return jnp.stack(blocks, axis=0)     # [len(POOLING)*G, U, H]


def local_mixture_pallas(seq_real, seq_imag, weights, meas_cat, w1s, b1, w2p, b2p):
    bsz = seq_real.shape[0]
    logits_pad = pl.pallas_call(
        _local_mixture_kernel,
        out_shape=jax.ShapeDtypeStruct((bsz, OUT_PAD), jnp.float32),
    )(seq_real, seq_imag, weights, meas_cat, w1s, b1, w2p, b2p)
    return logits_pad[:, :2]


# ------------------------------ JAX glue -------------------------------------
def ngram_windows(x, n):
    """NGram(gram_n=n): length-n sliding window along the sequence axis,
    zero-padded at the end so the output keeps the full sequence length."""
    pad = [(0, 0), (0, n - 1)] + [(0, 0)] * (x.ndim - 2)
    xp = jnp.pad(x, pad)
    idx = jnp.arange(x.shape[1])[:, None] + jnp.arange(n)[None, :]   # [S, n]
    return xp[:, idx]                                                # [B,S,n,...]


def local_mixture_nn_forward(params, input_seq, use_pallas=True):
    # TODO(synk): token-id embedding gather (data-dependent lookup) stays in
    # JAX glue; it has no clean rectangular BlockSpec expression.
    amplitude = params["lookup_table"][input_seq]          # [B,S,D]
    phase = params["phase_table"][input_seq]               # [B,S,D]
    # L2Norm(dim=-1, keep_dims=True)
    weights = jnp.sqrt(jnp.sum(amplitude * amplitude, axis=-1, keepdims=True))
    # L2Normalization(dim=-1)
    amplitude = amplitude / (weights + 1e-10)
    # ComplexMultiply([phase, amplitude])
    seq_real = amplitude * jnp.cos(phase)
    seq_imag = amplitude * jnp.sin(phase)

    mr = params["meas_kernel"][:, :, 0]                    # [U, D]
    mi = params["meas_kernel"][:, :, 1]                    # [U, D]

    if use_pallas:
        # one-time parameter layout prep (wrapper-side plumbing)
        meas_cat = jnp.concatenate([mr.T, mi.T], axis=1)   # [D, 2U]
        w1s = _slice_dense1_weight(params["w1"])           # [2G, U, H]
        b1 = params["b1"].reshape(1, -1)
        w2p = jnp.zeros((H, OUT_PAD), jnp.float32).at[:, :2].set(params["w2"])
        b2p = jnp.zeros((1, OUT_PAD), jnp.float32).at[0, :2].set(params["b2"])
        return local_mixture_pallas(seq_real, seq_imag, weights[..., 0],
                                    meas_cat, w1s, b1, w2p, b2p)

    # ---------------- pure-JAX reference (torch-style) path -------------------
    prob_list = []
    for n in NGRAM_VALUES:
        rw = ngram_windows(seq_real, n)                    # [B,S,n,D]
        iw = ngram_windows(seq_imag, n)
        ww = ngram_windows(weights, n)                     # [B,S,n,1]
        ww = jax.nn.softmax(ww, axis=1)                    # nn.Softmax(dim=1)
        prob_list.append(mixture_measurement_ref(rw, iw, ww, mr, mi))
    probs_tensor = jnp.stack(prob_list, axis=-1)           # [B,S,U,G]
    return head_ref(probs_tensor, params["w1"], params["b1"],
                    params["w2"], params["b2"])


# ----------------------- pure-JAX reference (torch-style) --------------------
def _outer(a, b):
    return a[..., :, None] * b[..., None, :]


def mixture_measurement_ref(rw, iw, ww, mr, mi):
    real_part = _outer(rw, rw) + _outer(iw, iw)            # [B,S,n,D,D]
    imag_part = _outer(iw, rw) - _outer(rw, iw)
    wexp = ww[..., None]                                   # [B,S,n,1,1]
    rho_r = jnp.sum(real_part * wexp, axis=2)              # [B,S,D,D]
    rho_i = jnp.sum(imag_part * wexp, axis=2)
    p_r = _outer(mr, mr) + _outer(mi, mi)                  # [U,D,D]
    p_i = _outer(mi, mr) - _outer(mr, mi)
    return (jnp.einsum("bsij,uij->bsu", rho_r, p_r)
            - jnp.einsum("bsij,uij->bsu", rho_i, p_i))


def head_ref(probs_tensor, w1, b1, w2, b2):
    pmax = jnp.max(probs_tensor, axis=1)                   # [B,U,G]
    pavg = jnp.mean(probs_tensor, axis=1)                  # [B,U,G]
    feat = jnp.concatenate([pmax, pavg], axis=-2)          # [B,2U,G]
    feat = feat.reshape(feat.shape[0], -1)                 # flatten(-2,-1)
    h = jax.nn.relu(feat @ w1 + b1)
    return h @ w2 + b2


# --------------------------- deterministic init -------------------------------
def init_params(key):
    k_lut, k_ph, k_meas, k_w1, k_b1, k_w2, k_b2 = jax.random.split(key, 7)
    lookup_table = jax.random.normal(k_lut, (V, D), jnp.float32)
    phase_table = jax.random.uniform(k_ph, (V, D), jnp.float32,
                                     minval=-math.pi, maxval=math.pi)
    meas = jax.random.uniform(k_meas, (U, D, 2), jnp.float32)
    meas_flat = meas.reshape(U, -1)
    meas = (meas_flat / (jnp.linalg.norm(meas_flat, axis=-1, keepdims=True)
                         + 1e-10)).reshape(U, D, 2)
    bnd1 = 1.0 / math.sqrt(DENSE1_IN)
    bnd2 = 1.0 / math.sqrt(H)
    return {
        "lookup_table": lookup_table,
        "phase_table": phase_table,
        "meas_kernel": meas,
        "w1": jax.random.uniform(k_w1, (DENSE1_IN, H), jnp.float32, -bnd1, bnd1),
        "b1": jax.random.uniform(k_b1, (H,), jnp.float32, -bnd1, bnd1),
        "w2": jax.random.uniform(k_w2, (H, 2), jnp.float32, -bnd2, bnd2),
        "b2": jax.random.uniform(k_b2, (2,), jnp.float32, -bnd2, bnd2),
    }


# ---------------------------------- main --------------------------------------
if __name__ == "__main__":
    key = jax.random.PRNGKey(0)
    k_params, k_seq = jax.random.split(key)
    params = init_params(k_params)
    input_seq = jax.random.randint(k_seq, (B, S), 0, V, dtype=jnp.int32)

    out_pallas = local_mixture_nn_forward(params, input_seq, use_pallas=True)
    out_pallas = jax.block_until_ready(out_pallas)

    out_ref = local_mixture_nn_forward(params, input_seq, use_pallas=False)
    out_ref = jax.block_until_ready(out_ref)

    assert out_pallas.shape == (B, 2) and out_pallas.dtype == jnp.float32
    max_err = float(jnp.max(jnp.abs(out_pallas - out_ref)))
    assert max_err < 1e-3, f"Pallas vs reference mismatch: {max_err}"

    print("KERNEL_OK")
</pallas_src>

<mosaic_0001>
module attributes {stable_mosaic.version = 11 : i64} {
  func.func @_local_mixture_kernel(%arg0: memref<2x8x32xf32, #tpu.memory_space<vmem>>, %arg1: memref<2x8x32xf32, #tpu.memory_space<vmem>>, %arg2: memref<2x8xf32, #tpu.memory_space<vmem>>, %arg3: memref<32x32xf32, #tpu.memory_space<vmem>>, %arg4: memref<4x16x32xf32, #tpu.memory_space<vmem>>, %arg5: memref<1x32xf32, #tpu.memory_space<vmem>>, %arg6: memref<32x128xf32, #tpu.memory_space<vmem>>, %arg7: memref<1x128xf32, #tpu.memory_space<vmem>>, %arg8: memref<2x128xf32, #tpu.memory_space<vmem>>) attributes {dimension_semantics = [], scalar_prefetch = 0 : i64, scratch_operands = 0 : i64, tpu.core_type = #tpu.core_type<tc>} {
    %c0 = arith.constant 0 : index
    %c0_0 = arith.constant 0 : index
    %c0_1 = arith.constant 0 : index
    %0 = vector.load %arg0[%c0, %c0_0, %c0_1] : memref<2x8x32xf32, #tpu.memory_space<vmem>>, vector<2x8x32xf32>
    %c0_2 = arith.constant 0 : index
    %c0_3 = arith.constant 0 : index
    %c0_4 = arith.constant 0 : index
    %1 = vector.load %arg1[%c0_2, %c0_3, %c0_4] : memref<2x8x32xf32, #tpu.memory_space<vmem>>, vector<2x8x32xf32>
    %c0_5 = arith.constant 0 : index
    %c0_6 = arith.constant 0 : index
    %2 = vector.load %arg2[%c0_5, %c0_6] : memref<2x8xf32, #tpu.memory_space<vmem>>, vector<2x8xf32>
    %c0_7 = arith.constant 0 : index
    %c0_8 = arith.constant 0 : index
    %3 = vector.load %arg3[%c0_7, %c0_8] : memref<32x32xf32, #tpu.memory_space<vmem>>, vector<32x32xf32>
    %4 = vector.shape_cast %0 : vector<2x8x32xf32> to vector<16x32xf32>
    %5 = vector.shape_cast %1 : vector<2x8x32xf32> to vector<16x32xf32>
    %cst = arith.constant dense<0.000000e+00> : vector<16x32xf32>
    %6 = tpu.matmul %4, %3, %cst {dimension_numbers = #tpu.dot_dimension_numbers<[1], [0], [0], [1], [0, 0, 1, 1], [], []>} : vector<16x32xf32>, vector<32x32xf32>, vector<16x32xf32> -> vector<16x32xf32>
    %cst_9 = arith.constant dense<0.000000e+00> : vector<16x32xf32>
    %7 = tpu.matmul %5, %3, %cst_9 {dimension_numbers = #tpu.dot_dimension_numbers<[1], [0], [0], [1], [0, 0, 1, 1], [], []>} : vector<16x32xf32>, vector<32x32xf32>, vector<16x32xf32> -> vector<16x32xf32>
    %8 = vector.extract_strided_slice %6 {offsets = [0, 0], sizes = [16, 16], strides = [1, 1]} : vector<16x32xf32> to vector<16x16xf32>
    %9 = vector.extract_strided_slice %6 {offsets = [0, 16], sizes = [16, 16], strides = [1, 1]} : vector<16x32xf32> to vector<16x16xf32>
    %10 = vector.extract_strided_slice %7 {offsets = [0, 0], sizes = [16, 16], strides = [1, 1]} : vector<16x32xf32> to vector<16x16xf32>
    %11 = vector.extract_strided_slice %7 {offsets = [0, 16], sizes = [16, 16], strides = [1, 1]} : vector<16x32xf32> to vector<16x16xf32>
    %12 = arith.subf %8, %11 : vector<16x16xf32>
    %13 = arith.mulf %12, %12 : vector<16x16xf32>
    %14 = arith.addf %9, %10 : vector<16x16xf32>
    %15 = arith.mulf %14, %14 : vector<16x16xf32>
    %16 = arith.addf %13, %15 : vector<16x16xf32>
    %17 = vector.shape_cast %16 : vector<16x16xf32> to vector<2x8x16xf32>
    %18 = math.exp %2 : vector<2x8xf32>
    %cst_10 = arith.constant dense<0.000000e+00> : vector<2xf32>
    %19 = vector.multi_reduction <add>, %18, %cst_10 [1] : vector<2x8xf32> to vector<2xf32>
    %20 = vector.shape_cast %19 : vector<2xf32> to vector<2x1xf32>
    %21 = tpu.iota {dimensions = array<i32: 0>} : vector<8x8xi32>
    %22 = tpu.iota {dimensions = array<i32: 1>} : vector<8x8xi32>
    %23 = arith.subi %22, %21 : vector<8x8xi32>
    %c0_i32 = arith.constant 0 : i32
    %24 = vector.broadcast %c0_i32 : i32 to vector<8x8xi32>
    %25 = arith.cmpi eq, %23, %24 : vector<8x8xi32>
    %26 = arith.extui %25 : vector<8x8xi1> to vector<8x8xi32>
    %27 = arith.sitofp %26 : vector<8x8xi32> to vector<8x8xf32>
    %28 = vector.shape_cast %27 : vector<8x8xf32> to vector<1x8x8xf32>
    %cst_11 = arith.constant 1.000000e+00 : f32
    %29 = vector.broadcast %cst_11 : f32 to vector<2x1xf32>
    %30 = arith.divf %29, %20 : vector<2x1xf32>
    %31 = vector.broadcast %30 : vector<2x1xf32> to vector<2x8xf32>
    %32 = arith.mulf %18, %31 : vector<2x8xf32>
    %33 = vector.shape_cast %32 : vector<2x8xf32> to vector<2x1x8xf32>
    %34 = vector.broadcast %28 : vector<1x8x8xf32> to vector<2x8x8xf32>
    %35 = vector.broadcast %33 : vector<2x1x8xf32> to vector<2x8x8xf32>
    %36 = arith.mulf %34, %35 : vector<2x8x8xf32>
    %37 = vector.extract_strided_slice %18 {offsets = [0, 0], sizes = [2, 1], strides = [1, 1]} : vector<2x8xf32> to vector<2x1xf32>
    %38 = arith.subf %20, %37 : vector<2x1xf32>
    %cst_12 = arith.constant 1.000000e+00 : f32
    %39 = vector.broadcast %cst_12 : f32 to vector<2x1xf32>
    %40 = arith.addf %38, %39 : vector<2x1xf32>
    %c1_i32 = arith.constant 1 : i32
    %41 = vector.broadcast %c1_i32 : i32 to vector<8x8xi32>
    %42 = arith.cmpi eq, %23, %41 : vector<8x8xi32>
    %43 = arith.extui %42 : vector<8x8xi1> to vector<8x8xi32>
    %44 = arith.sitofp %43 : vector<8x8xi32> to vector<8x8xf32>
    %45 = vector.shape_cast %44 : vector<8x8xf32> to vector<1x8x8xf32>
    %cst_13 = arith.constant 1.000000e+00 : f32
    %46 = vector.broadcast %cst_13 : f32 to vector<2x1xf32>
    %47 = arith.divf %46, %40 : vector<2x1xf32>
    %48 = vector.broadcast %47 : vector<2x1xf32> to vector<2x8xf32>
    %49 = arith.mulf %18, %48 : vector<2x8xf32>
    %50 = vector.shape_cast %49 : vector<2x8xf32> to vector<2x1x8xf32>
    %51 = vector.broadcast %45 : vector<1x8x8xf32> to vector<2x8x8xf32>
    %52 = vector.broadcast %50 : vector<2x1x8xf32> to vector<2x8x8xf32>
    %53 = arith.mulf %51, %52 : vector<2x8x8xf32>
    %54 = vector.extract_strided_slice %18 {offsets = [0, 1], sizes = [2, 1], strides = [1, 1]} : vector<2x8xf32> to vector<2x1xf32>
    %55 = arith.subf %40, %54 : vector<2x1xf32>
    %cst_14 = arith.constant 1.000000e+00 : f32
    %56 = vector.broadcast %cst_14 : f32 to vector<2x1xf32>
    %57 = arith.addf %55, %56 : vector<2x1xf32>
    %c2_i32 = arith.constant 2 : i32
    %58 = vector.broadcast %c2_i32 : i32 to vector<8x8xi32>
    %59 = arith.cmpi eq, %23, %58 : vector<8x8xi32>
    %60 = arith.extui %59 : vector<8x8xi1> to vector<8x8xi32>
    %61 = arith.sitofp %60 : vector<8x8xi32> to vector<8x8xf32>
    %62 = vector.shape_cast %61 : vector<8x8xf32> to vector<1x8x8xf32>
    %cst_15 = arith.constant 1.000000e+00 : f32
    %63 = vector.broadcast %cst_15 : f32 to vector<2x1xf32>
    %64 = arith.divf %63, %57 : vector<2x1xf32>
    %65 = vector.broadcast %64 : vector<2x1xf32> to vector<2x8xf32>
    %66 = arith.mulf %18, %65 : vector<2x8xf32>
    %67 = vector.shape_cast %66 : vector<2x8xf32> to vector<2x1x8xf32>
    %68 = vector.broadcast %62 : vector<1x8x8xf32> to vector<2x8x8xf32>
    %69 = vector.broadcast %67 : vector<2x1x8xf32> to vector<2x8x8xf32>
    %70 = arith.mulf %68, %69 : vector<2x8x8xf32>
    %c0_16 = arith.constant 0 : index
    %c0_17 = arith.constant 0 : index
    %71 = vector.load %arg5[%c0_16, %c0_17] : memref<1x32xf32, #tpu.memory_space<vmem>>, vector<1x32xf32>
    %72 = arith.addf %36, %53 : vector<2x8x8xf32>
    "tpu.trace_start"() <{level = 10 : i32, message = "bst,btu->bsu"}> : () -> ()
    %cst_18 = arith.constant dense<0.000000e+00> : vector<2x8x16xf32>
    %73 = tpu.matmul %72, %17, %cst_18 {dimension_numbers = #tpu.dot_dimension_numbers<[2], [1], [1], [2], [0, 0, 0, 1, 1, 2], [0], [0]>} : vector<2x8x8xf32>, vector<2x8x16xf32>, vector<2x8x16xf32> -> vector<2x8x16xf32>
    "tpu.trace_stop"() : () -> ()
    %cst_19 = arith.constant dense<0xFF800000> : vector<2x16xf32>
    %74 = vector.multi_reduction <maximumf>, %73, %cst_19 [1] : vector<2x8x16xf32> to vector<2x16xf32>
    %cst_20 = arith.constant dense<0.000000e+00> : vector<2x16xf32>
    %75 = vector.multi_reduction <add>, %73, %cst_20 [1] : vector<2x8x16xf32> to vector<2x16xf32>
    %cst_21 = arith.constant 8.000000e+00 : f32
    %76 = vector.broadcast %cst_21 : f32 to vector<2x16xf32>
    %77 = arith.divf %75, %76 : vector<2x16xf32>
    %c0_22 = arith.constant 0 : index
    %c0_23 = arith.constant 0 : index
    %c0_24 = arith.constant 0 : index
    %78 = vector.load %arg4[%c0_22, %c0_23, %c0_24] : memref<4x16x32xf32, #tpu.memory_space<vmem>>, vector<1x16x32xf32>
    %79 = vector.shape_cast %78 : vector<1x16x32xf32> to vector<16x32xf32>
    %cst_25 = arith.constant dense<0.000000e+00> : vector<2x32xf32>
    %80 = tpu.matmul %74, %79, %cst_25 {dimension_numbers = #tpu.dot_dimension_numbers<[1], [0], [0], [1], [0, 0, 1, 1], [], []>} : vector<2x16xf32>, vector<16x32xf32>, vector<2x32xf32> -> vector<2x32xf32>
    %81 = vector.broadcast %71 : vector<1x32xf32> to vector<2x32xf32>
    %82 = arith.addf %81, %80 : vector<2x32xf32>
    %c2 = arith.constant 2 : index
    %c0_26 = arith.constant 0 : index
    %c0_27 = arith.constant 0 : index
    %83 = vector.load %arg4[%c2, %c0_26, %c0_27] : memref<4x16x32xf32, #tpu.memory_space<vmem>>, vector<1x16x32xf32>
    %84 = vector.shape_cast %83 : vector<1x16x32xf32> to vector<16x32xf32>
    %cst_28 = arith.constant dense<0.000000e+00> : vector<2x32xf32>
    %85 = tpu.matmul %77, %84, %cst_28 {dimension_numbers = #tpu.dot_dimension_numbers<[1], [0], [0], [1], [0, 0, 1, 1], [], []>} : vector<2x16xf32>, vector<16x32xf32>, vector<2x32xf32> -> vector<2x32xf32>
    %86 = arith.addf %82, %85 : vector<2x32xf32>
    %87 = arith.addf %36, %53 : vector<2x8x8xf32>
    %88 = arith.addf %87, %70 : vector<2x8x8xf32>
    "tpu.trace_start"() <{level = 10 : i32, message = "bst,btu->bsu"}> : () -> ()
    %cst_29 = arith.constant dense<0.000000e+00> : vector<2x8x16xf32>
    %89 = tpu.matmul %88, %17, %cst_29 {dimension_numbers = #tpu.dot_dimension_numbers<[2], [1], [1], [2], [0, 0, 0, 1, 1, 2], [0], [0]>} : vector<2x8x8xf32>, vector<2x8x16xf32>, vector<2x8x16xf32> -> vector<2x8x16xf32>
    "tpu.trace_stop"() : () -> ()
    %cst_30 = arith.constant dense<0xFF800000> : vector<2x16xf32>
    %90 = vector.multi_reduction <maximumf>, %89, %cst_30 [1] : vector<2x8x16xf32> to vector<2x16xf32>
    %cst_31 = arith.constant dense<0.000000e+00> : vector<2x16xf32>
    %91 = vector.multi_reduction <add>, %89, %cst_31 [1] : vector<2x8x16xf32> to vector<2x16xf32>
    %cst_32 = arith.constant 8.000000e+00 : f32
    %92 = vector.broadcast %cst_32 : f32 to vector<2x16xf32>
    %93 = arith.divf %91, %92 : vector<2x16xf32>
    %c1 = arith.constant 1 : index
    %c0_33 = arith.constant 0 : index
    %c0_34 = arith.constant 0 : index
    %94 = vector.load %arg4[%c1, %c0_33, %c0_34] : memref<4x16x32xf32, #tpu.memory_space<vmem>>, vector<1x16x32xf32>
    %95 = vector.shape_cast %94 : vector<1x16x32xf32> to vector<16x32xf32>
    %cst_35 = arith.constant dense<0.000000e+00> : vector<2x32xf32>
    %96 = tpu.matmul %90, %95, %cst_35 {dimension_numbers = #tpu.dot_dimension_numbers<[1], [0], [0], [1], [0, 0, 1, 1], [], []>} : vector<2x16xf32>, vector<16x32xf32>, vector<2x32xf32> -> vector<2x32xf32>
    %97 = arith.addf %86, %96 : vector<2x32xf32>
    %c3 = arith.constant 3 : index
    %c0_36 = arith.constant 0 : index
    %c0_37 = arith.constant 0 : index
    %98 = vector.load %arg4[%c3, %c0_36, %c0_37] : memref<4x16x32xf32, #tpu.memory_space<vmem>>, vector<1x16x32xf32>
    %99 = vector.shape_cast %98 : vector<1x16x32xf32> to vector<16x32xf32>
    %cst_38 = arith.constant dense<0.000000e+00> : vector<2x32xf32>
    %100 = tpu.matmul %93, %99, %cst_38 {dimension_numbers = #tpu.dot_dimension_numbers<[1], [0], [0], [1], [0, 0, 1, 1], [], []>} : vector<2x16xf32>, vector<16x32xf32>, vector<2x32xf32> -> vector<2x32xf32>
    %101 = arith.addf %97, %100 : vector<2x32xf32>
    %cst_39 = arith.constant 0.000000e+00 : f32
    %102 = vector.broadcast %cst_39 : f32 to vector<2x32xf32>
    %103 = arith.maximumf %101, %102 : vector<2x32xf32>
    %c0_40 = arith.constant 0 : index
    %c0_41 = arith.constant 0 : index
    %104 = vector.load %arg6[%c0_40, %c0_41] : memref<32x128xf32, #tpu.memory_space<vmem>>, vector<32x128xf32>
    %cst_42 = arith.constant dense<0.000000e+00> : vector<2x128xf32>
    %105 = tpu.matmul %103, %104, %cst_42 {dimension_numbers = #tpu.dot_dimension_numbers<[1], [0], [0], [1], [0, 0, 1, 1], [], []>} : vector<2x32xf32>, vector<32x128xf32>, vector<2x128xf32> -> vector<2x128xf32>
    %c0_43 = arith.constant 0 : index
    %c0_44 = arith.constant 0 : index
    %106 = vector.load %arg7[%c0_43, %c0_44] : memref<1x128xf32, #tpu.memory_space<vmem>>, vector<1x128xf32>
    %107 = vector.broadcast %106 : vector<1x128xf32> to vector<2x128xf32>
    %108 = arith.addf %105, %107 : vector<2x128xf32>
    %c0_45 = arith.constant 0 : index
    %c0_46 = arith.constant 0 : index
    %109 = vector.load %arg8[%c0_45, %c0_46] : memref<2x128xf32, #tpu.memory_space<vmem>>, vector<2x128xf32>
    tpu.vector_store %arg8[%c0_45, %c0_46], %108 {strides = array<i32>} : memref<2x128xf32, #tpu.memory_space<vmem>>, vector<2x128xf32>,
    return
  }
}

</mosaic_0001>

<llo_original>
// kernel: tpu_custom_call.1
$region0: #{tpu_custom_call.1}
  #allocation0 [shape = 'u32[]', space=smem, size = 0x4, offset = 0x4, fixed_abs, tag = 'smem constant byte address 0x4 - core index']
  #allocation1 [shape = 'u32[144,128]{1,0:T(1,128)}', space=vmem, size = 0x12000, scoped, tag = 'internal scratch']
  %s0 = inlined_call_operand.hbm [shape: f32[2,8,32], index: 0, kind: input, shape index: {}]
  %s1 = inlined_call_operand.hbm [shape: f32[2,8,32], index: 1, kind: input, shape index: {}]
  %s2 = inlined_call_operand.vmem [shape: f32[2,8], index: 2, kind: input, shape index: {}]
  %s3 = inlined_call_operand.hbm [shape: f32[32,32], index: 3, kind: input, shape index: {}]
  %s4 = inlined_call_operand.hbm [shape: f32[4,16,32], index: 4, kind: input, shape index: {}]
  %s5 = inlined_call_operand.vmem [shape: f32[1,32], index: 5, kind: input, shape index: {}]
  %s6 = inlined_call_operand.hbm [shape: f32[32,128], index: 6, kind: input, shape index: {}]
  %s7 = inlined_call_operand.vmem [shape: f32[1,128], index: 7, kind: input, shape index: {}]
  %s8 = inlined_call_operand.hbm [shape: f32[2,128], index: 8, kind: output, shape index: {}]
  %s9 = sld [smem:[#allocation0]]
  $region62: #{tpu_custom_call.1} parent=0
    _
  %s11 = ssub.s32 1, %s9
  %s12 = scalar_select 0, %s11, %s9
  $region1: #{tpu_custom_call.1} parent=0
    #allocation2 [shape = 'u8[8192]{0}', space=vmem, size = 0x2000, scoped, tag = 'input window, operand 0, single buffered']
    #allocation3 [shape = 's32[1]{0}', space=sflag, size = 0x4, scoped, tag = 'scoped memory for tpu_custom_call.1']
    #allocation4 [shape = 's32[1]{0}', space=sflag, size = 0x4, scoped, tag = 'scoped memory for tpu_custom_call.1']
    #allocation5 [shape = 'u8[8192]{0}', space=vmem, size = 0x2000, scoped, tag = 'input window, operand 1, single buffered']
    #allocation6 [shape = 's32[1]{0}', space=sflag, size = 0x4, scoped, tag = 'scoped memory for tpu_custom_call.1']
    #allocation7 [shape = 'u8[16384]{0}', space=vmem, size = 0x4000, scoped, tag = 'input window, operand 3, single buffered']
    #allocation8 [shape = 'u8[32768]{0}', space=vmem, size = 0x8000, scoped, tag = 'input window, operand 4, single buffered']
    #allocation9 [shape = 's32[1]{0}', space=sflag, size = 0x4, scoped, tag = 'scoped memory for tpu_custom_call.1']
    #allocation10 [shape = 'u8[16384]{0}', space=vmem, size = 0x4000, scoped, tag = 'input window, operand 6, single buffered']
    #allocation11 [shape = 'u8[1024]{0}', space=vmem, size = 0x400, scoped, tag = 'output window, operand 0, single buffered']
    %13 = vsyncpa [#allocation3], 0
    %14 = vsyncpa [#allocation6], 0
    %15 = vsyncpa [#allocation9], 0
    %16 = vsyncpa [#allocation4], 0
    // Predicated region
    $region2: #{tpu_custom_call.1} parent=1 // pred_check
      _
    $region3: #{tpu_custom_call.1} parent=1 // pred_check_branch
      %18 = sbr.rel (0) target = $region5
    $region4: #{tpu_custom_call.1} parent=1 // pred_region
      %s20 = ssub.s32 256, 256
      %21 = vsyncadd [#allocation3], %s20
      %s22 = sshll.u32 [#allocation2], 4
      %s23 = int_to_ptr.vmem [resolvable:$true] %s22
      %28 = dma.hbm_to_vmem [thread:$0]  %s0, 256, %s23, [#allocation3], 128, 128, 8
    $region5: #{tpu_custom_call.1} parent=1 // pred_fallthru
      _
    // Predicated region
    $region6: #{tpu_custom_call.1} parent=1 // pred_check
      _
    $region7: #{tpu_custom_call.1} parent=1 // pred_check_branch
      %30 = sbr.rel (0) target = $region9
    $region8: #{tpu_custom_call.1} parent=1 // pred_region
      %s32 = ssub.s32 256, 256
      %33 = vsyncadd [#allocation6], %s32
      %s34 = sshll.u32 [#allocation5], 4
      %s35 = int_to_ptr.vmem [resolvable:$true] %s34
      %40 = dma.hbm_to_vmem [thread:$0]  %s1, 256, %s35, [#allocation6], 128, 128, 8
    $region9: #{tpu_custom_call.1} parent=1 // pred_fallthru
      _
    // Predicated region
    $region10: #{tpu_custom_call.1} parent=1 // pred_check
      _
    $region11: #{tpu_custom_call.1} parent=1 // pred_check_branch
      %42 = sbr.rel (0) target = $region13
    $region12: #{tpu_custom_call.1} parent=1 // pred_region
      _
    $region13: #{tpu_custom_call.1} parent=1 // pred_fallthru
      _
    // Predicated region
    $region14: #{tpu_custom_call.1} parent=1 // pred_check
      _
    $region15: #{tpu_custom_call.1} parent=1 // pred_check_branch
      %44 = sbr.rel (0) target = $region17
    $region16: #{tpu_custom_call.1} parent=1 // pred_region
      %s46 = ssub.s32 512, 512
      %47 = vsyncadd [#allocation6], %s46
      %s48 = sshll.u32 [#allocation7], 4
      %s49 = int_to_ptr.vmem [resolvable:$true] %s48
      %54 = dma.hbm_to_vmem [thread:$0]  %s3, 512, %s49, [#allocation6], 128, 128, 8
    $region17: #{tpu_custom_call.1} parent=1 // pred_fallthru
      _
    // Predicated region
    $region18: #{tpu_custom_call.1} parent=1 // pred_check
      _
    $region19: #{tpu_custom_call.1} parent=1 // pred_check_branch
      %56 = sbr.rel (0) target = $region21
    $region20: #{tpu_custom_call.1} parent=1 // pred_region
      %s58 = ssub.s32 1024, 1024
      %59 = vsyncadd [#allocation9], %s58
      %s60 = sshll.u32 [#allocation8], 4
      %s61 = int_to_ptr.vmem [resolvable:$true] %s60
      %66 = dma.hbm_to_vmem [thread:$0]  %s4, 1024, %s61, [#allocation9], 128, 128, 8
    $region21: #{tpu_custom_call.1} parent=1 // pred_fallthru
      _
    // Predicated region
    $region22: #{tpu_custom_call.1} parent=1 // pred_check
      _
    $region23: #{tpu_custom_call.1} parent=1 // pred_check_branch
      %68 = sbr.rel (0) target = $region25
    $region24: #{tpu_custom_call.1} parent=1 // pred_region
      _
    $region25: #{tpu_custom_call.1} parent=1 // pred_fallthru
      _
    // Predicated region
    $region26: #{tpu_custom_call.1} parent=1 // pred_check
      _
    $region27: #{tpu_custom_call.1} parent=1 // pred_check_branch
      %70 = sbr.rel (0) target = $region29
    $region28: #{tpu_custom_call.1} parent=1 // pred_region
      %s72 = ssub.s32 512, 512
      %73 = vsyncadd [#allocation9], %s72
      %s74 = sshll.u32 [#allocation10], 4
      %s75 = int_to_ptr.vmem [resolvable:$true] %s74
      %80 = dma.hbm_to_vmem [thread:$0]  %s6, 512, %s75, [#allocation9], 128, 128, 8
    $region29: #{tpu_custom_call.1} parent=1 // pred_fallthru
      _
    // Predicated region
    $region30: #{tpu_custom_call.1} parent=1 // pred_check
      _
    $region31: #{tpu_custom_call.1} parent=1 // pred_check_branch
      %82 = sbr.rel (0) target = $region33
    $region32: #{tpu_custom_call.1} parent=1 // pred_region
      _
    $region33: #{tpu_custom_call.1} parent=1 // pred_fallthru
      _
    // Predicated region
    $region34: #{tpu_custom_call.1} parent=1 // pred_check
      _
    $region35: #{tpu_custom_call.1} parent=1 // pred_check_branch
      %84 = sbr.rel (0) target = $region37
    $region36: #{tpu_custom_call.1} parent=1 // pred_region
      %85 = dma.done [#allocation3], 256
    $region37: #{tpu_custom_call.1} parent=1 // pred_fallthru
      _
    // Predicated region
    $region38: #{tpu_custom_call.1} parent=1 // pred_check
      _
    $region39: #{tpu_custom_call.1} parent=1 // pred_check_branch
      %87 = sbr.rel (0) target = $region41
    $region40: #{tpu_custom_call.1} parent=1 // pred_region
      %88 = dma.done [#allocation6], 256
    $region41: #{tpu_custom_call.1} parent=1 // pred_fallthru
      _
    // Predicated region
    $region42: #{tpu_custom_call.1} parent=1 // pred_check
      _
    $region43: #{tpu_custom_call.1} parent=1 // pred_check_branch
      %90 = sbr.rel (0) target = $region45
    $region44: #{tpu_custom_call.1} parent=1 // pred_region
      %91 = dma.done [#allocation6], 512
    $region45: #{tpu_custom_call.1} parent=1 // pred_fallthru
      _
    // Predicated region
    $region46: #{tpu_custom_call.1} parent=1 // pred_check
      _
    $region47: #{tpu_custom_call.1} parent=1 // pred_check_branch
      %93 = sbr.rel (0) target = $region49
    $region48: #{tpu_custom_call.1} parent=1 // pred_region
      %94 = dma.done [#allocation9], 1024
    $region49: #{tpu_custom_call.1} parent=1 // pred_fallthru
      _
    // Predicated region
    $region50: #{tpu_custom_call.1} parent=1 // pred_check
      _
    $region51: #{tpu_custom_call.1} parent=1 // pred_check_branch
      %96 = sbr.rel (0) target = $region53
    $region52: #{tpu_custom_call.1} parent=1 // pred_region
      %97 = dma.done [#allocation9], 512
    $region53: #{tpu_custom_call.1} parent=1 // pred_fallthru
      _
    %v98 = vld [vmem:[#allocation2] sm:$0xff]
    %v99 = vld [vmem:[#allocation2 + $0x8] sm:$0xff]
    %v100 = vld [vmem:[#allocation5] sm:$0xff]
    %v101 = vld [vmem:[#allocation5 + $0x8] sm:$0xff]
    %v102 = vld [vmem:[%s2] sm:$0x3]
    %v103 = vld [vmem:[#allocation7] sm:$0xff]
    %v104 = vld [vmem:[#allocation7 + $0x8] sm:$0xff]
    %v105 = vld [vmem:[#allocation7 + $0x10] sm:$0xff]
    %v106 = vld [vmem:[#allocation7 + $0x18] sm:$0xff]
    %vm107 = vcmask 261120
    %v109 = vsel %vm107, %v98, 0
    %v112 = vsel %vm107, %v99, 0
    %114 = vmatprep.subr.mxu0 0.0
    %115 = vmatpush1.msra.mxu0 %v103
    %116 = vmatprep.subr.mxu0 0.0
    %117 = vmatpush1.msra.mxu0 %v104
    %118 = vmatprep.subr.mxu0 0.0
    %119 = vmatpush1.msra.mxu0 %v105
    %120 = vmatprep.subr.mxu0 0.0
    %121 = vmatpush1.msra.mxu0 %v106
    %122 = vmatprep.subr.mxu0 0.0
    %123 = vmatpush1.msra.mxu0 0.0
    %124 = vmatprep.subr.mxu0 0.0
    %125 = vmatpush1.msra.mxu0 0.0
    %126 = vmatprep.subr.mxu0 0.0
    %127 = vmatpush1.msra.mxu0 0.0
    %128 = vmatprep.subr.mxu0 0.0
    %129 = vmatpush1.msra.mxu0 0.0
    %130 = vmatprep.subr.mxu0 0.0
    %131 = vmatpush1.msra.mxu0 0.0
    %132 = vmatprep.subr.mxu0 0.0
    %133 = vmatpush1.msra.mxu0 0.0
    %134 = vmatprep.subr.mxu0 0.0
    %135 = vmatpush1.msra.mxu0 0.0
    %136 = vmatprep.subr.mxu0 0.0
    %137 = vmatpush1.msra.mxu0 0.0
    %138 = vmatprep.subr.mxu0 0.0
    %139 = vmatpush1.msra.mxu0 0.0
    %140 = vmatprep.subr.mxu0 0.0
    %141 = vmatpush1.msra.mxu0 0.0
    %142 = vmatprep.subr.mxu0 0.0
    %143 = vmatpush1.msra.mxu0 0.0
    %144 = vmatprep.subr.mxu0 0.0
    %145 = vmatpush1.msra.mxu0 0.0
    %146 = vmatprep.subr.mxu0 0.0
    %147 = vmatpush1.msra.mxu0 0.0
    %148 = vmatprep.subr.mxu0 0.0
    %149 = vmatpush1.msra.mxu0 0.0
    %150 = vmatprep.subr.mxu0 0.0
    %151 = vmatpush1.msra.mxu0 0.0
    %152 = vmatprep.subr.mxu0 0.0
    %153 = vmatpush1.msra.mxu0 0.0
    %154 = vmatprep.subr.mxu0 0.0
    %155 = vmatpush1.msra.mxu0 0.0
    %156 = vmatprep.subr.mxu0 0.0
    %157 = vmatpush1.msra.mxu0 0.0
    %158 = vmatprep.subr.mxu0 0.0
    %159 = vmatpush1.msra.mxu0 0.0
    %160 = vmatprep.subr.mxu0 0.0
    %161 = vmatpush1.msra.mxu0 0.0
    %162 = vmatprep.subr.mxu0 0.0
    %163 = vmatpush1.msra.mxu0 0.0
    %164 = vmatprep.subr.mxu0 0.0
    %165 = vmatpush1.msra.mxu0 0.0
    %166 = vmatprep.subr.mxu0 0.0
    %167 = vmatpush1.msra.mxu0 0.0
    %168 = vmatprep.subr.mxu0 0.0
    %169 = vmatpush1.msra.mxu0 0.0
    %170 = vmatprep.subr.mxu0 0.0
    %171 = vmatpush1.msra.mxu0 0.0
    %172 = vmatprep.subr.mxu0 0.0
    %173 = vmatpush1.msra.mxu0 0.0
    %174 = vmatprep.subr.mxu0 0.0
    %175 = vmatpush1.msra.mxu0 0.0
    %176 = vmatprep.subr.mxu0 0.0
    %177 = vmatpush1.msra.mxu0 0.0
    %178 = vmatprep.mubr.f32.mxu0 0.0
    %179 = vmatmul.mubr.f32.gmra.mrb[0].mxu0 %v109
    %v180 = vpop.f32.mrb[0].mxu0
    %v181 = vadd.f32 0.0, %v180
    %v182 = vpop.f32.mrb[0].mxu0
    %183 = vmatprep.mubr.f32.mxu0 0.0
    %184 = vmatmul.mubr.f32.gmra.mrb[0].mxu0 %v112
    %v185 = vpop.f32.mrb[0].mxu0
    %v186 = vadd.f32 0.0, %v185
    %v187 = vpop.f32.mrb[0].mxu0
    %188 = vdwg.mxu0
    %v190 = vsel %vm107, %v100, 0
    %v193 = vsel %vm107, %v101, 0
    %195 = vmatprep.subr.mxu0 0.0
    %196 = vmatpush1.msra.mxu0 %v103
    %197 = vmatprep.subr.mxu0 0.0
    %198 = vmatpush1.msra.mxu0 %v104
    %199 = vmatprep.subr.mxu0 0.0
    %200 = vmatpush1.msra.mxu0 %v105
    %201 = vmatprep.subr.mxu0 0.0
    %202 = vmatpush1.msra.mxu0 %v106
    %203 = vmatprep.subr.mxu0 0.0
    %204 = vmatpush1.msra.mxu0 0.0
    %205 = vmatprep.subr.mxu0 0.0
    %206 = vmatpush1.msra.mxu0 0.0
    %207 = vmatprep.subr.mxu0 0.0
    %208 = vmatpush1.msra.mxu0 0.0
    %209 = vmatprep.subr.mxu0 0.0
    %210 = vmatpush1.msra.mxu0 0.0
    %211 = vmatprep.subr.mxu0 0.0
    %212 = vmatpush1.msra.mxu0 0.0
    %213 = vmatprep.subr.mxu0 0.0
    %214 = vmatpush1.msra.mxu0 0.0
    %215 = vmatprep.subr.mxu0 0.0
    %216 = vmatpush1.msra.mxu0 0.0
    %217 = vmatprep.subr.mxu0 0.0
    %218 = vmatpush1.msra.mxu0 0.0
    %219 = vmatprep.subr.mxu0 0.0
    %220 = vmatpush1.msra.mxu0 0.0
    %221 = vmatprep.subr.mxu0 0.0
    %222 = vmatpush1.msra.mxu0 0.0
    %223 = vmatprep.subr.mxu0 0.0
    %224 = vmatpush1.msra.mxu0 0.0
    %225 = vmatprep.subr.mxu0 0.0
    %226 = vmatpush1.msra.mxu0 0.0
    %227 = vmatprep.subr.mxu0 0.0
    %228 = vmatpush1.msra.mxu0 0.0
    %229 = vmatprep.subr.mxu0 0.0
    %230 = vmatpush1.msra.mxu0 0.0
    %231 = vmatprep.subr.mxu0 0.0
    %232 = vmatpush1.msra.mxu0 0.0
    %233 = vmatprep.subr.mxu0 0.0
    %234 = vmatpush1.msra.mxu0 0.0
    %235 = vmatprep.subr.mxu0 0.0
    %236 = vmatpush1.msra.mxu0 0.0
    %237 = vmatprep.subr.mxu0 0.0
    %238 = vmatpush1.msra.mxu0 0.0
    %239 = vmatprep.subr.mxu0 0.0
    %240 = vmatpush1.msra.mxu0 0.0
    %241 = vmatprep.subr.mxu0 0.0
    %242 = vmatpush1.msra.mxu0 0.0
    %243 = vmatprep.subr.mxu0 0.0
    %244 = vmatpush1.msra.mxu0 0.0
    %245 = vmatprep.subr.mxu0 0.0
    %246 = vmatpush1.msra.mxu0 0.0
    %247 = vmatprep.subr.mxu0 0.0
    %248 = vmatpush1.msra.mxu0 0.0
    %249 = vmatprep.subr.mxu0 0.0
    %250 = vmatpush1.msra.mxu0 0.0
    %251 = vmatprep.subr.mxu0 0.0
    %252 = vmatpush1.msra.mxu0 0.0
    %253 = vmatprep.subr.mxu0 0.0
    %254 = vmatpush1.msra.mxu0 0.0
    %255 = vmatprep.subr.mxu0 0.0
    %256 = vmatpush1.msra.mxu0 0.0
    %257 = vmatprep.subr.mxu0 0.0
    %258 = vmatpush1.msra.mxu0 0.0
    %259 = vmatprep.mubr.f32.mxu0 0.0
    %260 = vmatmul.mubr.f32.gmra.mrb[0].mxu0 %v190
    %v261 = vpop.f32.mrb[0].mxu0
    %v262 = vadd.f32 0.0, %v261
    %v263 = vpop.f32.mrb[0].mxu0
    %264 = vmatprep.mubr.f32.mxu0 0.0
    %265 = vmatmul.mubr.f32.gmra.mrb[0].mxu0 %v193
    %v266 = vpop.f32.mrb[0].mxu0
    %v267 = vadd.f32 0.0, %v266
    %v268 = vpop.f32.mrb[0].mxu0
    %269 = vdwg.mxu0
    %272 = vrot.lane.b32.xlu0 %v262, 112
    %v273 = vpop.permute.xlu0 %272
    %274 = vrot.lane.b32.xlu0 %v267, 112
    %v275 = vpop.permute.xlu0 %274
    %v278 = vsub.f32 %v181, %v273
    %v279 = vsub.f32 %v186, %v275
    %v280 = vmul.f32 %v278, %v278
    %v281 = vmul.f32 %v279, %v279
    %282 = vrot.lane.b32.xlu0 %v262, 16
    %v283 = vpop.permute.xlu0 %282
    %284 = vrot.lane.b32.xlu0 %v267, 16
    %v285 = vpop.permute.xlu0 %284
    %v288 = vadd.f32 %v181, %v283
    %v289 = vadd.f32 %v186, %v285
    %v290 = vmul.f32 %v288, %v288
    %v291 = vmul.f32 %v289, %v289
    %294 = vrot.lane.b32.xlu0 %v290, 112
    %v295 = vpop.permute.xlu0 %294
    %296 = vrot.lane.b32.xlu0 %v291, 112
    %v297 = vpop.permute.xlu0 %296
    %v300 = vadd.f32 %v280, %v295
    %v301 = vadd.f32 %v281, %v297
    %v302 = vmul.f32 %v102, 1.442695
    %v303 = vpow.pop %v302
    %vm304 = vcmask 58368
    %v305 = vsel %vm304, %v303, 0.0
    %306 = vadd.xlane.f32.xlu0 %v305
    %v307 = vpop.xlane.xlu0 %306
    %v308 = vlaneseq
    %v309 = vshrl.u32 %v308, 7
    %v310 = vlaneseq
    %v311 = vand.u32 %v310, 127
    %v312 = vsub.s32 %v311, %v309
    %vm313 = vcmp.eq.s32.totalorder %v312, 0
    %v314 = vsel %vm313, 1, 0
    %v315 = vcvt.s32.f32 %v314
    %v316 = vrcp.pop %v307
    %v317 = vmul.f32 1.0, %v316
    %v318 = vmul.f32 %v303, %v317
    %v321 = vunpack.c.l.s4 1966171168
    %v322 = vunpack.c.0.s8 %v321
    %v323 = vlaneseq
    %v324 = vshrl.u32 %v323, 7
    %v325 = vsub.s32 %v322, %v324
    %v326 = vrot.slane %v318, %v325
    %v327 = vcombine.high %v326, %v326
    %v329 = vunpack.c.l.s4 1966171168
    %v330 = vunpack.c.0.s8 %v329
    %v331 = vlaneseq
    %v332 = vshrl.u32 %v331, 7
    %v333 = vsub.s32 %v330, %v332
    %v334 = vrot.slane %v326, %v333
    %v336 = vunpack.c.l.s4 1966171168
    %v337 = vunpack.c.0.s8 %v336
    %v338 = vlaneseq
    %v339 = vshrl.u32 %v338, 7
    %v340 = vsub.s32 %v337, %v339
    %v341 = vrot.slane %v327, %v340
    %v342 = vlaneseq
    %v343 = vshrl.u32 %v342, 7
    %v344 = vsub.s32 0, %v343
    %v345 = vrot.slane %v334, %v344
    %v346 = vlaneseq
    %v347 = vshrl.u32 %v346, 7
    %v348 = vsub.s32 0, %v347
    %v349 = vrot.slane %v341, %v348
    %v352 = vmul.f32 %v315, %v345
    %v353 = vmul.f32 %v315, %v349
    %v354 = vsub.f32 %v307, %v303
    %v355 = vadd.f32 %v354, 1.0
    %vm356 = vcmp.eq.s32.totalorder %v312, 1
    %v357 = vsel %vm356, 1, 0
    %v358 = vcvt.s32.f32 %v357
    %v359 = vrcp.pop %v355
    %v360 = vmul.f32 1.0, %v359
    %362 = vset.pattern.permute.xlu0 0
    %363 = vperm.xlu0 %362, %v360
    %v364 = vpop.permute.xlu0 %363
    %v366 = vmul.f32 %v303, %v364
    %v369 = vunpack.c.l.s4 1966171168
    %v370 = vunpack.c.0.s8 %v369
    %v371 = vlaneseq
    %v372 = vshrl.u32 %v371, 7
    %v373 = vsub.s32 %v370, %v372
    %v374 = vrot.slane %v366, %v373
    %v375 = vcombine.high %v374, %v374
    %v377 = vunpack.c.l.s4 1966171168
    %v378 = vunpack.c.0.s8 %v377
    %v379 = vlaneseq
    %v380 = vshrl.u32 %v379, 7
    %v381 = vsub.s32 %v378, %v380
    %v382 = vrot.slane %v374, %v381
    %v384 = vunpack.c.l.s4 1966171168
    %v385 = vunpack.c.0.s8 %v384
    %v386 = vlaneseq
    %v387 = vshrl.u32 %v386, 7
    %v388 = vsub.s32 %v385, %v387
    %v389 = vrot.slane %v375, %v388
    %v390 = vlaneseq
    %v391 = vshrl.u32 %v390, 7
    %v392 = vsub.s32 0, %v391
    %v393 = vrot.slane %v382, %v392
    %v394 = vlaneseq
    %v395 = vshrl.u32 %v394, 7
    %v396 = vsub.s32 0, %v395
    %v397 = vrot.slane %v389, %v396
    %v400 = vmul.f32 %v358, %v393
    %v401 = vmul.f32 %v358, %v397
    %403 = vrot.lane.b32.xlu0 %v303, 127
    %v404 = vpop.permute.xlu0 %403
    %v406 = vsub.f32 %v355, %v404
    %v407 = vadd.f32 %v406, 1.0
    %vm408 = vcmp.eq.s32.totalorder %v312, 2
    %v409 = vsel %vm408, 1, 0
    %v410 = vcvt.s32.f32 %v409
    %v411 = vrcp.pop %v407
    %v412 = vmul.f32 1.0, %v411
    %414 = vset.pattern.permute.xlu0 0
    %415 = vperm.xlu0 %414, %v412
    %v416 = vpop.permute.xlu0 %415
    %v418 = vmul.f32 %v303, %v416
    %v421 = vunpack.c.l.s4 1966171168
    %v422 = vunpack.c.0.s8 %v421
    %v423 = vlaneseq
    %v424 = vshrl.u32 %v423, 7
    %v425 = vsub.s32 %v422, %v424
    %v426 = vrot.slane %v418, %v425
    %v427 = vcombine.high %v426, %v426
    %v429 = vunpack.c.l.s4 1966171168
    %v430 = vunpack.c.0.s8 %v429
    %v431 = vlaneseq
    %v432 = vshrl.u32 %v431, 7
    %v433 = vsub.s32 %v430, %v432
    %v434 = vrot.slane %v426, %v433
    %v436 = vunpack.c.l.s4 1966171168
    %v437 = vunpack.c.0.s8 %v436
    %v438 = vlaneseq
    %v439 = vshrl.u32 %v438, 7
    %v440 = vsub.s32 %v437, %v439
    %v441 = vrot.slane %v427, %v440
    %v442 = vlaneseq
    %v443 = vshrl.u32 %v442, 7
    %v444 = vsub.s32 0, %v443
    %v445 = vrot.slane %v434, %v444
    %v446 = vlaneseq
    %v447 = vshrl.u32 %v446, 7
    %v448 = vsub.s32 0, %v447
    %v449 = vrot.slane %v441, %v448
    %v452 = vmul.f32 %v410, %v445
    %v453 = vmul.f32 %v410, %v449
    %v454 = vld [vmem:[%s5] sm:$0x1]
    %v455 = vadd.f32 %v352, %v400
    %v456 = vadd.f32 %v353, %v401
    %vm457 = vcmask 64512
    %v459 = vsel %vm457, %v455, 0
    %461 = vmatprep.subr.mxu0 0.0
    %462 = vmatpush1.msra.mxu0 %v300
    %463 = vmatprep.subr.mxu0 0.0
    %464 = vmatpush1.msra.mxu0 0.0
    %465 = vmatprep.subr.mxu0 0.0
    %466 = vmatpush1.msra.mxu0 0.0
    %467 = vmatprep.subr.mxu0 0.0
    %468 = vmatpush1.msra.mxu0 0.0
    %469 = vmatprep.subr.mxu0 0.0
    %470 = vmatpush1.msra.mxu0 0.0
    %471 = vmatprep.subr.mxu0 0.0
    %472 = vmatpush1.msra.mxu0 0.0
    %473 = vmatprep.subr.mxu0 0.0
    %474 = vmatpush1.msra.mxu0 0.0
    %475 = vmatprep.subr.mxu0 0.0
    %476 = vmatpush1.msra.mxu0 0.0
    %477 = vmatprep.subr.mxu0 0.0
    %478 = vmatpush1.msra.mxu0 0.0
    %479 = vmatprep.subr.mxu0 0.0
    %480 = vmatpush1.msra.mxu0 0.0
    %481 = vmatprep.subr.mxu0 0.0
    %482 = vmatpush1.msra.mxu0 0.0
    %483 = vmatprep.subr.mxu0 0.0
    %484 = vmatpush1.msra.mxu0 0.0
    %485 = vmatprep.subr.mxu0 0.0
    %486 = vmatpush1.msra.mxu0 0.0
    %487 = vmatprep.subr.mxu0 0.0
    %488 = vmatpush1.msra.mxu0 0.0
    %489 = vmatprep.subr.mxu0 0.0
    %490 = vmatpush1.msra.mxu0 0.0
    %491 = vmatprep.subr.mxu0 0.0
    %492 = vmatpush1.msra.mxu0 0.0
    %493 = vmatprep.subr.mxu0 0.0
    %494 = vmatpush1.msra.mxu0 0.0
    %495 = vmatprep.subr.mxu0 0.0
    %496 = vmatpush1.msra.mxu0 0.0
    %497 = vmatprep.subr.mxu0 0.0
    %498 = vmatpush1.msra.mxu0 0.0
    %499 = vmatprep.subr.mxu0 0.0
    %500 = vmatpush1.msra.mxu0 0.0
    %501 = vmatprep.subr.mxu0 0.0
    %502 = vmatpush1.msra.mxu0 0.0
    %503 = vmatprep.subr.mxu0 0.0
    %504 = vmatpush1.msra.mxu0 0.0
    %505 = vmatprep.subr.mxu0 0.0
    %506 = vmatpush1.msra.mxu0 0.0
    %507 = vmatprep.subr.mxu0 0.0
    %508 = vmatpush1.msra.mxu0 0.0
    %509 = vmatprep.subr.mxu0 0.0
    %510 = vmatpush1.msra.mxu0 0.0
    %511 = vmatprep.subr.mxu0 0.0
    %512 = vmatpush1.msra.mxu0 0.0
    %513 = vmatprep.subr.mxu0 0.0
    %514 = vmatpush1.msra.mxu0 0.0
    %515 = vmatprep.subr.mxu0 0.0
    %516 = vmatpush1.msra.mxu0 0.0
    %517 = vmatprep.subr.mxu0 0.0
    %518 = vmatpush1.msra.mxu0 0.0
    %519 = vmatprep.subr.mxu0 0.0
    %520 = vmatpush1.msra.mxu0 0.0
    %521 = vmatprep.subr.mxu0 0.0
    %522 = vmatpush1.msra.mxu0 0.0
    %523 = vmatprep.subr.mxu0 0.0
    %524 = vmatpush1.msra.mxu0 0.0
    %525 = vmatprep.mubr.f32.mxu0 0.0
    %526 = vmatmul.mubr.f32.gmra.mrb[0].mxu0 %v459
    %v527 = vpop.f32.mrb[0].mxu0
    %v528 = vadd.f32 0.0, %v527
    %v529 = vpop.f32.mrb[0].mxu0
    %530 = vdwg.mxu0
    %v532 = vsel %vm457, %v456, 0
    %534 = vmatprep.subr.mxu0 0.0
    %535 = vmatpush1.msra.mxu0 %v301
    %536 = vmatprep.subr.mxu0 0.0
    %537 = vmatpush1.msra.mxu0 0.0
    %538 = vmatprep.subr.mxu0 0.0
    %539 = vmatpush1.msra.mxu0 0.0
    %540 = vmatprep.subr.mxu0 0.0
    %541 = vmatpush1.msra.mxu0 0.0
    %542 = vmatprep.subr.mxu0 0.0
    %543 = vmatpush1.msra.mxu0 0.0
    %544 = vmatprep.subr.mxu0 0.0
    %545 = vmatpush1.msra.mxu0 0.0
    %546 = vmatprep.subr.mxu0 0.0
    %547 = vmatpush1.msra.mxu0 0.0
    %548 = vmatprep.subr.mxu0 0.0
    %549 = vmatpush1.msra.mxu0 0.0
    %550 = vmatprep.subr.mxu0 0.0
    %551 = vmatpush1.msra.mxu0 0.0
    %552 = vmatprep.subr.mxu0 0.0
    %553 = vmatpush1.msra.mxu0 0.0
    %554 = vmatprep.subr.mxu0 0.0
    %555 = vmatpush1.msra.mxu0 0.0
    %556 = vmatprep.subr.mxu0 0.0
    %557 = vmatpush1.msra.mxu0 0.0
    %558 = vmatprep.subr.mxu0 0.0
    %559 = vmatpush1.msra.mxu0 0.0
    %560 = vmatprep.subr.mxu0 0.0
    %561 = vmatpush1.msra.mxu0 0.0
    %562 = vmatprep.subr.mxu0 0.0
    %563 = vmatpush1.msra.mxu0 0.0
    %564 = vmatprep.subr.mxu0 0.0
    %565 = vmatpush1.msra.mxu0 0.0
    %566 = vmatprep.subr.mxu0 0.0
    %567 = vmatpush1.msra.mxu0 0.0
    %568 = vmatprep.subr.mxu0 0.0
    %569 = vmatpush1.msra.mxu0 0.0
    %570 = vmatprep.subr.mxu0 0.0
    %571 = vmatpush1.msra.mxu0 0.0
    %572 = vmatprep.subr.mxu0 0.0
    %573 = vmatpush1.msra.mxu0 0.0
    %574 = vmatprep.subr.mxu0 0.0
    %575 = vmatpush1.msra.mxu0 0.0
    %576 = vmatprep.subr.mxu0 0.0
    %577 = vmatpush1.msra.mxu0 0.0
    %578 = vmatprep.subr.mxu0 0.0
    %579 = vmatpush1.msra.mxu0 0.0
    %580 = vmatprep.subr.mxu0 0.0
    %581 = vmatpush1.msra.mxu0 0.0
    %582 = vmatprep.subr.mxu0 0.0
    %583 = vmatpush1.msra.mxu0 0.0
    %584 = vmatprep.subr.mxu0 0.0
    %585 = vmatpush1.msra.mxu0 0.0
    %586 = vmatprep.subr.mxu0 0.0
    %587 = vmatpush1.msra.mxu0 0.0
    %588 = vmatprep.subr.mxu0 0.0
    %589 = vmatpush1.msra.mxu0 0.0
    %590 = vmatprep.subr.mxu0 0.0
    %591 = vmatpush1.msra.mxu0 0.0
    %592 = vmatprep.subr.mxu0 0.0
    %593 = vmatpush1.msra.mxu0 0.0
    %594 = vmatprep.subr.mxu0 0.0
    %595 = vmatpush1.msra.mxu0 0.0
    %596 = vmatprep.subr.mxu0 0.0
    %597 = vmatpush1.msra.mxu0 0.0
    %598 = vmatprep.mubr.f32.mxu0 0.0
    %599 = vmatmul.mubr.f32.gmra.mrb[0].mxu0 %v532
    %v600 = vpop.f32.mrb[0].mxu0
    %v601 = vadd.f32 0.0, %v600
    %v602 = vpop.f32.mrb[0].mxu0
    %603 = vdwg.mxu0
    %vm604 = vcmask 130048
    %v605 = vsel %vm604, %v528, -inf
    %v606 = vrot.slane %v605, 4
    %v607 = vmax.f32 %v605, %v606
    %v608 = vrot.slane %v607, 2
    %v609 = vmax.f32 %v607, %v608
    %v610 = vrot.slane %v609, 1
    %v611 = vmax.f32 %v609, %v610
    %v612 = vsel %vm604, %v601, -inf
    %v613 = vrot.slane %v612, 4
    %v614 = vmax.f32 %v612, %v613
    %v615 = vrot.slane %v614, 2
    %v616 = vmax.f32 %v614, %v615
    %v617 = vrot.slane %v616, 1
    %v618 = vmax.f32 %v616, %v617
    %v619 = vsel %vm604, %v528, 0.0
    %v620 = vrot.slane %v619, 4
    %v621 = vadd.f32 %v619, %v620
    %v622 = vrot.slane %v621, 2
    %v623 = vadd.f32 %v621, %v622
    %v624 = vrot.slane %v623, 1
    %v625 = vadd.f32 %v623, %v624
    %v626 = vsel %vm604, %v601, 0.0
    %v627 = vrot.slane %v626, 4
    %v628 = vadd.f32 %v626, %v627
    %v629 = vrot.slane %v628, 2
    %v630 = vadd.f32 %v628, %v629
    %v631 = vrot.slane %v630, 1
    %v632 = vadd.f32 %v630, %v631
    %v633 = vrcp.pop 8.0
    %v634 = vmul.f32 %v625, %v633
    %v635 = vmul.f32 %v632, %v633
    %v636 = vld [vmem:[#allocation8] sm:$0xff]
    %v637 = vld [vmem:[#allocation8 + $0x8] sm:$0xff]
    %vm640 = vcmask 1041409
    %v641 = vsel %vm640, %v618, %v611
    %v642 = vsel %vm604, %v641, 0
    %644 = vmatprep.subr.mxu0 0.0
    %645 = vmatpush1.msra.mxu0 %v636
    %646 = vmatprep.subr.mxu0 0.0
    %647 = vmatpush1.msra.mxu0 %v637
    %648 = vmatprep.subr.mxu0 0.0
    %649 = vmatpush1.msra.mxu0 0.0
    %650 = vmatprep.subr.mxu0 0.0
    %651 = vmatpush1.msra.mxu0 0.0
    %652 = vmatprep.subr.mxu0 0.0
    %653 = vmatpush1.msra.mxu0 0.0
    %654 = vmatprep.subr.mxu0 0.0
    %655 = vmatpush1.msra.mxu0 0.0
    %656 = vmatprep.subr.mxu0 0.0
    %657 = vmatpush1.msra.mxu0 0.0
    %658 = vmatprep.subr.mxu0 0.0
    %659 = vmatpush1.msra.mxu0 0.0
    %660 = vmatprep.subr.mxu0 0.0
    %661 = vmatpush1.msra.mxu0 0.0
    %662 = vmatprep.subr.mxu0 0.0
    %663 = vmatpush1.msra.mxu0 0.0
    %664 = vmatprep.subr.mxu0 0.0
    %665 = vmatpush1.msra.mxu0 0.0
    %666 = vmatprep.subr.mxu0 0.0
    %667 = vmatpush1.msra.mxu0 0.0
    %668 = vmatprep.subr.mxu0 0.0
    %669 = vmatpush1.msra.mxu0 0.0
    %670 = vmatprep.subr.mxu0 0.0
    %671 = vmatpush1.msra.mxu0 0.0
    %672 = vmatprep.subr.mxu0 0.0
    %673 = vmatpush1.msra.mxu0 0.0
    %674 = vmatprep.subr.mxu0 0.0
    %675 = vmatpush1.msra.mxu0 0.0
    %676 = vmatprep.subr.mxu0 0.0
    %677 = vmatpush1.msra.mxu0 0.0
    %678 = vmatprep.subr.mxu0 0.0
    %679 = vmatpush1.msra.mxu0 0.0
    %680 = vmatprep.subr.mxu0 0.0
    %681 = vmatpush1.msra.mxu0 0.0
    %682 = vmatprep.subr.mxu0 0.0
    %683 = vmatpush1.msra.mxu0 0.0
    %684 = vmatprep.subr.mxu0 0.0
    %685 = vmatpush1.msra.mxu0 0.0
    %686 = vmatprep.subr.mxu0 0.0
    %687 = vmatpush1.msra.mxu0 0.0
    %688 = vmatprep.subr.mxu0 0.0
    %689 = vmatpush1.msra.mxu0 0.0
    %690 = vmatprep.subr.mxu0 0.0
    %691 = vmatpush1.msra.mxu0 0.0
    %692 = vmatprep.subr.mxu0 0.0
    %693 = vmatpush1.msra.mxu0 0.0
    %694 = vmatprep.subr.mxu0 0.0
    %695 = vmatpush1.msra.mxu0 0.0
    %696 = vmatprep.subr.mxu0 0.0
    %697 = vmatpush1.msra.mxu0 0.0
    %698 = vmatprep.subr.mxu0 0.0
    %699 = vmatpush1.msra.mxu0 0.0
    %700 = vmatprep.subr.mxu0 0.0
    %701 = vmatpush1.msra.mxu0 0.0
    %702 = vmatprep.subr.mxu0 0.0
    %703 = vmatpush1.msra.mxu0 0.0
    %704 = vmatprep.subr.mxu0 0.0
    %705 = vmatpush1.msra.mxu0 0.0
    %706 = vmatprep.subr.mxu0 0.0
    %707 = vmatpush1.msra.mxu0 0.0
    %708 = vmatprep.mubr.f32.mxu0 0.0
    %709 = vmatmul.mubr.f32.gmra.mrb[0].mxu0 %v642
    %v710 = vpop.f32.mrb[0].mxu0
    %v711 = vadd.f32 0.0, %v710
    %v712 = vpop.f32.mrb[0].mxu0
    %713 = vdwg.mxu0
    %v715 = vlaneseq
    %v716 = vshrl.u32 %v715, 7
    %v717 = vsub.s32 0, %v716
    %v718 = vrot.slane %v454, %v717
    %v720 = vadd.f32 %v718, %v711
    %s721 = scalar_lea.vmem [#allocation8], 32
    %v722 = vld [vmem:[%s721] sm:$0xff]
    %v723 = vld [vmem:[%s721 + $0x8] sm:$0xff]
    %v726 = vsel %vm640, %v635, %v634
    %v727 = vsel %vm604, %v726, 0
    %729 = vmatprep.subr.mxu0 0.0
    %730 = vmatpush1.msra.mxu0 %v722
    %731 = vmatprep.subr.mxu0 0.0
    %732 = vmatpush1.msra.mxu0 %v723
    %733 = vmatprep.subr.mxu0 0.0
    %734 = vmatpush1.msra.mxu0 0.0
    %735 = vmatprep.subr.mxu0 0.0
    %736 = vmatpush1.msra.mxu0 0.0
    %737 = vmatprep.subr.mxu0 0.0
    %738 = vmatpush1.msra.mxu0 0.0
    %739 = vmatprep.subr.mxu0 0.0
    %740 = vmatpush1.msra.mxu0 0.0
    %741 = vmatprep.subr.mxu0 0.0
    %742 = vmatpush1.msra.mxu0 0.0
    %743 = vmatprep.subr.mxu0 0.0
    %744 = vmatpush1.msra.mxu0 0.0
    %745 = vmatprep.subr.mxu0 0.0
    %746 = vmatpush1.msra.mxu0 0.0
    %747 = vmatprep.subr.mxu0 0.0
    %748 = vmatpush1.msra.mxu0 0.0
    %749 = vmatprep.subr.mxu0 0.0
    %750 = vmatpush1.msra.mxu0 0.0
    %751 = vmatprep.subr.mxu0 0.0
    %752 = vmatpush1.msra.mxu0 0.0
    %753 = vmatprep.subr.mxu0 0.0
    %754 = vmatpush1.msra.mxu0 0.0
    %755 = vmatprep.subr.mxu0 0.0
    %756 = vmatpush1.msra.mxu0 0.0
    %757 = vmatprep.subr.mxu0 0.0
    %758 = vmatpush1.msra.mxu0 0.0
    %759 = vmatprep.subr.mxu0 0.0
    %760 = vmatpush1.msra.mxu0 0.0
    %761 = vmatprep.subr.mxu0 0.0
    %762 = vmatpush1.msra.mxu0 0.0
    %763 = vmatprep.subr.mxu0 0.0
    %764 = vmatpush1.msra.mxu0 0.0
    %765 = vmatprep.subr.mxu0 0.0
    %766 = vmatpush1.msra.mxu0 0.0
    %767 = vmatprep.subr.mxu0 0.0
    %768 = vmatpush1.msra.mxu0 0.0
    %769 = vmatprep.subr.mxu0 0.0
    %770 = vmatpush1.msra.mxu0 0.0
    %771 = vmatprep.subr.mxu0 0.0
    %772 = vmatpush1.msra.mxu0 0.0
    %773 = vmatprep.subr.mxu0 0.0
    %774 = vmatpush1.msra.mxu0 0.0
    %775 = vmatprep.subr.mxu0 0.0
    %776 = vmatpush1.msra.mxu0 0.0
    %777 = vmatprep.subr.mxu0 0.0
    %778 = vmatpush1.msra.mxu0 0.0
    %779 = vmatprep.subr.mxu0 0.0
    %780 = vmatpush1.msra.mxu0 0.0
    %781 = vmatprep.subr.mxu0 0.0
    %782 = vmatpush1.msra.mxu0 0.0
    %783 = vmatprep.subr.mxu0 0.0
    %784 = vmatpush1.msra.mxu0 0.0
    %785 = vmatprep.subr.mxu0 0.0
    %786 = vmatpush1.msra.mxu0 0.0
    %787 = vmatprep.subr.mxu0 0.0
    %788 = vmatpush1.msra.mxu0 0.0
    %789 = vmatprep.subr.mxu0 0.0
    %790 = vmatpush1.msra.mxu0 0.0
    %791 = vmatprep.subr.mxu0 0.0
    %792 = vmatpush1.msra.mxu0 0.0
    %793 = vmatprep.mubr.f32.mxu0 0.0
    %794 = vmatmul.mubr.f32.gmra.mrb[0].mxu0 %v727
    %v795 = vpop.f32.mrb[0].mxu0
    %v796 = vadd.f32 0.0, %v795
    %v797 = vpop.f32.mrb[0].mxu0
    %798 = vdwg.mxu0
    %v799 = vadd.f32 %v720, %v796
    %v800 = vadd.f32 %v455, %v452
    %v801 = vadd.f32 %v456, %v453
    %v803 = vsel %vm457, %v800, 0
    %805 = vmatprep.subr.mxu0 0.0
    %806 = vmatpush1.msra.mxu0 %v300
    %807 = vmatprep.subr.mxu0 0.0
    %808 = vmatpush1.msra.mxu0 0.0
    %809 = vmatprep.subr.mxu0 0.0
    %810 = vmatpush1.msra.mxu0 0.0
    %811 = vmatprep.subr.mxu0 0.0
    %812 = vmatpush1.msra.mxu0 0.0
    %813 = vmatprep.subr.mxu0 0.0
    %814 = vmatpush1.msra.mxu0 0.0
    %815 = vmatprep.subr.mxu0 0.0
    %816 = vmatpush1.msra.mxu0 0.0
    %817 = vmatprep.subr.mxu0 0.0
    %818 = vmatpush1.msra.mxu0 0.0
    %819 = vmatprep.subr.mxu0 0.0
    %820 = vmatpush1.msra.mxu0 0.0
    %821 = vmatprep.subr.mxu0 0.0
    %822 = vmatpush1.msra.mxu0 0.0
    %823 = vmatprep.subr.mxu0 0.0
    %824 = vmatpush1.msra.mxu0 0.0
    %825 = vmatprep.subr.mxu0 0.0
    %826 = vmatpush1.msra.mxu0 0.0
    %827 = vmatprep.subr.mxu0 0.0
    %828 = vmatpush1.msra.mxu0 0.0
    %829 = vmatprep.subr.mxu0 0.0
    %830 = vmatpush1.msra.mxu0 0.0
    %831 = vmatprep.subr.mxu0 0.0
    %832 = vmatpush1.msra.mxu0 0.0
    %833 = vmatprep.subr.mxu0 0.0
    %834 = vmatpush1.msra.mxu0 0.0
    %835 = vmatprep.subr.mxu0 0.0
    %836 = vmatpush1.msra.mxu0 0.0
    %837 = vmatprep.subr.mxu0 0.0
    %838 = vmatpush1.msra.mxu0 0.0
    %839 = vmatprep.subr.mxu0 0.0
    %840 = vmatpush1.msra.mxu0 0.0
    %841 = vmatprep.subr.mxu0 0.0
    %842 = vmatpush1.msra.mxu0 0.0
    %843 = vmatprep.subr.mxu0 0.0
    %844 = vmatpush1.msra.mxu0 0.0
    %845 = vmatprep.subr.mxu0 0.0
    %846 = vmatpush1.msra.mxu0 0.0
    %847 = vmatprep.subr.mxu0 0.0
    %848 = vmatpush1.msra.mxu0 0.0
    %849 = vmatprep.subr.mxu0 0.0
    %850 = vmatpush1.msra.mxu0 0.0
    %851 = vmatprep.subr.mxu0 0.0
    %852 = vmatpush1.msra.mxu0 0.0
    %853 = vmatprep.subr.mxu0 0.0
    %854 = vmatpush1.msra.mxu0 0.0
    %855 = vmatprep.subr.mxu0 0.0
    %856 = vmatpush1.msra.mxu0 0.0
    %857 = vmatprep.subr.mxu0 0.0
    %858 = vmatpush1.msra.mxu0 0.0
    %859 = vmatprep.subr.mxu0 0.0
    %860 = vmatpush1.msra.mxu0 0.0
    %861 = vmatprep.subr.mxu0 0.0
    %862 = vmatpush1.msra.mxu0 0.0
    %863 = vmatprep.subr.mxu0 0.0
    %864 = vmatpush1.msra.mxu0 0.0
    %865 = vmatprep.subr.mxu0 0.0
    %866 = vmatpush1.msra.mxu0 0.0
    %867 = vmatprep.subr.mxu0 0.0
    %868 = vmatpush1.msra.mxu0 0.0
    %869 = vmatprep.mubr.f32.mxu0 0.0
    %870 = vmatmul.mubr.f32.gmra.mrb[0].mxu0 %v803
    %v871 = vpop.f32.mrb[0].mxu0
    %v872 = vadd.f32 0.0, %v871
    %v873 = vpop.f32.mrb[0].mxu0
    %874 = vdwg.mxu0
    %v876 = vsel %vm457, %v801, 0
    %878 = vmatprep.subr.mxu0 0.0
    %879 = vmatpush1.msra.mxu0 %v301
    %880 = vmatprep.subr.mxu0 0.0
    %881 = vmatpush1.msra.mxu0 0.0
    %882 = vmatprep.subr.mxu0 0.0
    %883 = vmatpush1.msra.mxu0 0.0
    %884 = vmatprep.subr.mxu0 0.0
    %885 = vmatpush1.msra.mxu0 0.0
    %886 = vmatprep.subr.mxu0 0.0
    %887 = vmatpush1.msra.mxu0 0.0
    %888 = vmatprep.subr.mxu0 0.0
    %889 = vmatpush1.msra.mxu0 0.0
    %890 = vmatprep.subr.mxu0 0.0
    %891 = vmatpush1.msra.mxu0 0.0
    %892 = vmatprep.subr.mxu0 0.0
    %893 = vmatpush1.msra.mxu0 0.0
    %894 = vmatprep.subr.mxu0 0.0
    %895 = vmatpush1.msra.mxu0 0.0
    %896 = vmatprep.subr.mxu0 0.0
    %897 = vmatpush1.msra.mxu0 0.0
    %898 = vmatprep.subr.mxu0 0.0
    %899 = vmatpush1.msra.mxu0 0.0
    %900 = vmatprep.subr.mxu0 0.0
    %901 = vmatpush1.msra.mxu0 0.0
    %902 = vmatprep.subr.mxu0 0.0
    %903 = vmatpush1.msra.mxu0 0.0
    %904 = vmatprep.subr.mxu0 0.0
    %905 = vmatpush1.msra.mxu0 0.0
    %906 = vmatprep.subr.mxu0 0.0
    %907 = vmatpush1.msra.mxu0 0.0
    %908 = vmatprep.subr.mxu0 0.0
    %909 = vmatpush1.msra.mxu0 0.0
    %910 = vmatprep.subr.mxu0 0.0
    %911 = vmatpush1.msra.mxu0 0.0
    %912 = vmatprep.subr.mxu0 0.0
    %913 = vmatpush1.msra.mxu0 0.0
    %914 = vmatprep.subr.mxu0 0.0
    %915 = vmatpush1.msra.mxu0 0.0
    %916 = vmatprep.subr.mxu0 0.0
    %917 = vmatpush1.msra.mxu0 0.0
    %918 = vmatprep.subr.mxu0 0.0
    %919 = vmatpush1.msra.mxu0 0.0
    %920 = vmatprep.subr.mxu0 0.0
    %921 = vmatpush1.msra.mxu0 0.0
    %922 = vmatprep.subr.mxu0 0.0
    %923 = vmatpush1.msra.mxu0 0.0
    %924 = vmatprep.subr.mxu0 0.0
    %925 = vmatpush1.msra.mxu0 0.0
    %926 = vmatprep.subr.mxu0 0.0
    %927 = vmatpush1.msra.mxu0 0.0
    %928 = vmatprep.subr.mxu0 0.0
    %929 = vmatpush1.msra.mxu0 0.0
    %930 = vmatprep.subr.mxu0 0.0
    %931 = vmatpush1.msra.mxu0 0.0
    %932 = vmatprep.subr.mxu0 0.0
    %933 = vmatpush1.msra.mxu0 0.0
    %934 = vmatprep.subr.mxu0 0.0
    %935 = vmatpush1.msra.mxu0 0.0
    %936 = vmatprep.subr.mxu0 0.0
    %937 = vmatpush1.msra.mxu0 0.0
    %938 = vmatprep.subr.mxu0 0.0
    %939 = vmatpush1.msra.mxu0 0.0
    %940 = vmatprep.subr.mxu0 0.0
    %941 = vmatpush1.msra.mxu0 0.0
    %942 = vmatprep.mubr.f32.mxu0 0.0
    %943 = vmatmul.mubr.f32.gmra.mrb[0].mxu0 %v876
    %v944 = vpop.f32.mrb[0].mxu0
    %v945 = vadd.f32 0.0, %v944
    %v946 = vpop.f32.mrb[0].mxu0
    %947 = vdwg.mxu0
    %v948 = vsel %vm604, %v872, -inf
    %v949 = vrot.slane %v948, 4
    %v950 = vmax.f32 %v948, %v949
    %v951 = vrot.slane %v950, 2
    %v952 = vmax.f32 %v950, %v951
    %v953 = vrot.slane %v952, 1
    %v954 = vmax.f32 %v952, %v953
    %v955 = vsel %vm604, %v945, -inf
    %v956 = vrot.slane %v955, 4
    %v957 = vmax.f32 %v955, %v956
    %v958 = vrot.slane %v957, 2
    %v959 = vmax.f32 %v957, %v958
    %v960 = vrot.slane %v959, 1
    %v961 = vmax.f32 %v959, %v960
    %v962 = vsel %vm604, %v872, 0.0
    %v963 = vrot.slane %v962, 4
    %v964 = vadd.f32 %v962, %v963
    %v965 = vrot.slane %v964, 2
    %v966 = vadd.f32 %v964, %v965
    %v967 = vrot.slane %v966, 1
    %v968 = vadd.f32 %v966, %v967
    %v969 = vsel %vm604, %v945, 0.0
    %v970 = vrot.slane %v969, 4
    %v971 = vadd.f32 %v969, %v970
    %v972 = vrot.slane %v971, 2
    %v973 = vadd.f32 %v971, %v972
    %v974 = vrot.slane %v973, 1
    %v975 = vadd.f32 %v973, %v974
    %v976 = vmul.f32 %v968, %v633
    %v977 = vmul.f32 %v975, %v633
    %s978 = scalar_lea.vmem [#allocation8], 16
    %v979 = vld [vmem:[%s978] sm:$0xff]
    %v980 = vld [vmem:[%s978 + $0x8] sm:$0xff]
    %v983 = vsel %vm640, %v961, %v954
    %v984 = vsel %vm604, %v983, 0
    %986 = vmatprep.subr.mxu0 0.0
    %987 = vmatpush1.msra.mxu0 %v979
    %988 = vmatprep.subr.mxu0 0.0
    %989 = vmatpush1.msra.mxu0 %v980
    %990 = vmatprep.subr.mxu0 0.0
    %991 = vmatpush1.msra.mxu0 0.0
    %992 = vmatprep.subr.mxu0 0.0
    %993 = vmatpush1.msra.mxu0 0.0
    %994 = vmatprep.subr.mxu0 0.0
    %995 = vmatpush1.msra.mxu0 0.0
    %996 = vmatprep.subr.mxu0 0.0
    %997 = vmatpush1.msra.mxu0 0.0
    %998 = vmatprep.subr.mxu0 0.0
    %999 = vmatpush1.msra.mxu0 0.0
    %1000 = vmatprep.subr.mxu0 0.0
    %1001 = vmatpush1.msra.mxu0 0.0
    %1002 = vmatprep.subr.mxu0 0.0
    %1003 = vmatpush1.msra.mxu0 0.0
    %1004 = vmatprep.subr.mxu0 0.0
    %1005 = vmatpush1.msra.mxu0 0.0
    %1006 = vmatprep.subr.mxu0 0.0
    %1007 = vmatpush1.msra.mxu0 0.0
    %1008 = vmatprep.subr.mxu0 0.0
    %1009 = vmatpush1.msra.mxu0 0.0
    %1010 = vmatprep.subr.mxu0 0.0
    %1011 = vmatpush1.msra.mxu0 0.0
    %1012 = vmatprep.subr.mxu0 0.0
    %1013 = vmatpush1.msra.mxu0 0.0
    %1014 = vmatprep.subr.mxu0 0.0
    %1015 = vmatpush1.msra.mxu0 0.0
    %1016 = vmatprep.subr.mxu0 0.0
    %1017 = vmatpush1.msra.mxu0 0.0
    %1018 = vmatprep.subr.mxu0 0.0
    %1019 = vmatpush1.msra.mxu0 0.0
    %1020 = vmatprep.subr.mxu0 0.0
    %1021 = vmatpush1.msra.mxu0 0.0
    %1022 = vmatprep.subr.mxu0 0.0
    %1023 = vmatpush1.msra.mxu0 0.0
    %1024 = vmatprep.subr.mxu0 0.0
    %1025 = vmatpush1.msra.mxu0 0.0
    %1026 = vmatprep.subr.mxu0 0.0
    %1027 = vmatpush1.msra.mxu0 0.0
    %1028 = vmatprep.subr.mxu0 0.0
    %1029 = vmatpush1.msra.mxu0 0.0
    %1030 = vmatprep.subr.mxu0 0.0
    %1031 = vmatpush1.msra.mxu0 0.0
    %1032 = vmatprep.subr.mxu0 0.0
    %1033 = vmatpush1.msra.mxu0 0.0
    %1034 = vmatprep.subr.mxu0 0.0
    %1035 = vmatpush1.msra.mxu0 0.0
    %1036 = vmatprep.subr.mxu0 0.0
    %1037 = vmatpush1.msra.mxu0 0.0
    %1038 = vmatprep.subr.mxu0 0.0
    %1039 = vmatpush1.msra.mxu0 0.0
    %1040 = vmatprep.subr.mxu0 0.0
    %1041 = vmatpush1.msra.mxu0 0.0
    %1042 = vmatprep.subr.mxu0 0.0
    %1043 = vmatpush1.msra.mxu0 0.0
    %1044 = vmatprep.subr.mxu0 0.0
    %1045 = vmatpush1.msra.mxu0 0.0
    %1046 = vmatprep.subr.mxu0 0.0
    %1047 = vmatpush1.msra.mxu0 0.0
    %1048 = vmatprep.subr.mxu0 0.0
    %1049 = vmatpush1.msra.mxu0 0.0
    %1050 = vmatprep.mubr.f32.mxu0 0.0
    %1051 = vmatmul.mubr.f32.gmra.mrb[0].mxu0 %v984
    %v1052 = vpop.f32.mrb[0].mxu0
    %v1053 = vadd.f32 0.0, %v1052
    %v1054 = vpop.f32.mrb[0].mxu0
    %1055 = vdwg.mxu0
    %v1056 = vadd.f32 %v799, %v1053
    %s1057 = scalar_lea.vmem [#allocation8], 48
    %v1058 = vld [vmem:[%s1057] sm:$0xff]
    %v1059 = vld [vmem:[%s1057 + $0x8] sm:$0xff]
    %v1062 = vsel %vm640, %v977, %v976
    %v1063 = vsel %vm604, %v1062, 0
    %1065 = vmatprep.subr.mxu0 0.0
    %1066 = vmatpush1.msra.mxu0 %v1058
    %1067 = vmatprep.subr.mxu0 0.0
    %1068 = vmatpush1.msra.mxu0 %v1059
    %1069 = vmatprep.subr.mxu0 0.0
    %1070 = vmatpush1.msra.mxu0 0.0
    %1071 = vmatprep.subr.mxu0 0.0
    %1072 = vmatpush1.msra.mxu0 0.0
    %1073 = vmatprep.subr.mxu0 0.0
    %1074 = vmatpush1.msra.mxu0 0.0
    %1075 = vmatprep.subr.mxu0 0.0
    %1076 = vmatpush1.msra.mxu0 0.0
    %1077 = vmatprep.subr.mxu0 0.0
    %1078 = vmatpush1.msra.mxu0 0.0
    %1079 = vmatprep.subr.mxu0 0.0
    %1080 = vmatpush1.msra.mxu0 0.0
    %1081 = vmatprep.subr.mxu0 0.0
    %1082 = vmatpush1.msra.mxu0 0.0
    %1083 = vmatprep.subr.mxu0 0.0
    %1084 = vmatpush1.msra.mxu0 0.0
    %1085 = vmatprep.subr.mxu0 0.0
    %1086 = vmatpush1.msra.mxu0 0.0
    %1087 = vmatprep.subr.mxu0 0.0
    %1088 = vmatpush1.msra.mxu0 0.0
    %1089 = vmatprep.subr.mxu0 0.0
    %1090 = vmatpush1.msra.mxu0 0.0
    %1091 = vmatprep.subr.mxu0 0.0
    %1092 = vmatpush1.msra.mxu0 0.0
    %1093 = vmatprep.subr.mxu0 0.0
    %1094 = vmatpush1.msra.mxu0 0.0
    %1095 = vmatprep.subr.mxu0 0.0
    %1096 = vmatpush1.msra.mxu0 0.0
    %1097 = vmatprep.subr.mxu0 0.0
    %1098 = vmatpush1.msra.mxu0 0.0
    %1099 = vmatprep.subr.mxu0 0.0
    %1100 = vmatpush1.msra.mxu0 0.0
    %1101 = vmatprep.subr.mxu0 0.0
    %1102 = vmatpush1.msra.mxu0 0.0
    %1103 = vmatprep.subr.mxu0 0.0
    %1104 = vmatpush1.msra.mxu0 0.0
    %1105 = vmatprep.subr.mxu0 0.0
    %1106 = vmatpush1.msra.mxu0 0.0
    %1107 = vmatprep.subr.mxu0 0.0
    %1108 = vmatpush1.msra.mxu0 0.0
    %1109 = vmatprep.subr.mxu0 0.0
    %1110 = vmatpush1.msra.mxu0 0.0
    %1111 = vmatprep.subr.mxu0 0.0
    %1112 = vmatpush1.msra.mxu0 0.0
    %1113 = vmatprep.subr.mxu0 0.0
    %1114 = vmatpush1.msra.mxu0 0.0
    %1115 = vmatprep.subr.mxu0 0.0
    %1116 = vmatpush1.msra.mxu0 0.0
    %1117 = vmatprep.subr.mxu0 0.0
    %1118 = vmatpush1.msra.mxu0 0.0
    %1119 = vmatprep.subr.mxu0 0.0
    %1120 = vmatpush1.msra.mxu0 0.0
    %1121 = vmatprep.subr.mxu0 0.0
    %1122 = vmatpush1.msra.mxu0 0.0
    %1123 = vmatprep.subr.mxu0 0.0
    %1124 = vmatpush1.msra.mxu0 0.0
    %1125 = vmatprep.subr.mxu0 0.0
    %1126 = vmatpush1.msra.mxu0 0.0
    %1127 = vmatprep.subr.mxu0 0.0
    %1128 = vmatpush1.msra.mxu0 0.0
    %1129 = vmatprep.mubr.f32.mxu0 0.0
    %1130 = vmatmul.mubr.f32.gmra.mrb[0].mxu0 %v1063
    %v1131 = vpop.f32.mrb[0].mxu0
    %v1132 = vadd.f32 0.0, %v1131
    %v1133 = vpop.f32.mrb[0].mxu0
    %1134 = vdwg.mxu0
    %v1135 = vadd.f32 %v1056, %v1132
    %v1136 = vmax.f32 %v1135, 0.0
    %v1137 = vld [vmem:[#allocation10] sm:$0xff]
    %v1138 = vld [vmem:[#allocation10 + $0x8] sm:$0xff]
    %v1139 = vld [vmem:[#allocation10 + $0x10] sm:$0xff]
    %v1140 = vld [vmem:[#allocation10 + $0x18] sm:$0xff]
    %v1141 = vld [vmem:[%s7] sm:$0x1]
    %v1143 = vlaneseq
    %v1144 = vshrl.u32 %v1143, 7
    %v1145 = vsub.s32 0, %v1144
    %v1146 = vrot.slane %v1141, %v1145
    %v1149 = vsel %vm107, %v1136, 0
    %1151 = vmatprep.subr.mxu0 0.0
    %1152 = vmatpush1.msra.mxu0 %v1137
    %1153 = vmatprep.subr.mxu0 0.0
    %1154 = vmatpush1.msra.mxu0 %v1138
    %1155 = vmatprep.subr.mxu0 0.0
    %1156 = vmatpush1.msra.mxu0 %v1139
    %1157 = vmatprep.subr.mxu0 0.0
    %1158 = vmatpush1.msra.mxu0 %v1140
    %1159 = vmatprep.subr.mxu0 0.0
    %1160 = vmatpush1.msra.mxu0 0.0
    %1161 = vmatprep.subr.mxu0 0.0
    %1162 = vmatpush1.msra.mxu0 0.0
    %1163 = vmatprep.subr.mxu0 0.0
    %1164 = vmatpush1.msra.mxu0 0.0
    %1165 = vmatprep.subr.mxu0 0.0
    %1166 = vmatpush1.msra.mxu0 0.0
    %1167 = vmatprep.subr.mxu0 0.0
    %1168 = vmatpush1.msra.mxu0 0.0
    %1169 = vmatprep.subr.mxu0 0.0
    %1170 = vmatpush1.msra.mxu0 0.0
    %1171 = vmatprep.subr.mxu0 0.0
    %1172 = vmatpush1.msra.mxu0 0.0
    %1173 = vmatprep.subr.mxu0 0.0
    %1174 = vmatpush1.msra.mxu0 0.0
    %1175 = vmatprep.subr.mxu0 0.0
    %1176 = vmatpush1.msra.mxu0 0.0
    %1177 = vmatprep.subr.mxu0 0.0
    %1178 = vmatpush1.msra.mxu0 0.0
    %1179 = vmatprep.subr.mxu0 0.0
    %1180 = vmatpush1.msra.mxu0 0.0
    %1181 = vmatprep.subr.mxu0 0.0
    %1182 = vmatpush1.msra.mxu0 0.0
    %1183 = vmatprep.subr.mxu0 0.0
    %1184 = vmatpush1.msra.mxu0 0.0
    %1185 = vmatprep.subr.mxu0 0.0
    %1186 = vmatpush1.msra.mxu0 0.0
    %1187 = vmatprep.subr.mxu0 0.0
    %1188 = vmatpush1.msra.mxu0 0.0
    %1189 = vmatprep.subr.mxu0 0.0
    %1190 = vmatpush1.msra.mxu0 0.0
    %1191 = vmatprep.subr.mxu0 0.0
    %1192 = vmatpush1.msra.mxu0 0.0
    %1193 = vmatprep.subr.mxu0 0.0
    %1194 = vmatpush1.msra.mxu0 0.0
    %1195 = vmatprep.subr.mxu0 0.0
    %1196 = vmatpush1.msra.mxu0 0.0
    %1197 = vmatprep.subr.mxu0 0.0
    %1198 = vmatpush1.msra.mxu0 0.0
    %1199 = vmatprep.subr.mxu0 0.0
    %1200 = vmatpush1.msra.mxu0 0.0
    %1201 = vmatprep.subr.mxu0 0.0
    %1202 = vmatpush1.msra.mxu0 0.0
    %1203 = vmatprep.subr.mxu0 0.0
    %1204 = vmatpush1.msra.mxu0 0.0
    %1205 = vmatprep.subr.mxu0 0.0
    %1206 = vmatpush1.msra.mxu0 0.0
    %1207 = vmatprep.subr.mxu0 0.0
    %1208 = vmatpush1.msra.mxu0 0.0
    %1209 = vmatprep.subr.mxu0 0.0
    %1210 = vmatpush1.msra.mxu0 0.0
    %1211 = vmatprep.subr.mxu0 0.0
    %1212 = vmatpush1.msra.mxu0 0.0
    %1213 = vmatprep.subr.mxu0 0.0
    %1214 = vmatpush1.msra.mxu0 0.0
    %1215 = vmatprep.mubr.f32.mxu0 0.0
    %1216 = vmatmul.mubr.f32.gmra.mrb[0].mxu0 %v1149
    %v1217 = vpop.f32.mrb[0].mxu0
    %v1218 = vadd.f32 %v1146, %v1217
    %v1219 = vpop.f32.mrb[0].mxu0
    %1220 = vdwg.mxu0
    %1221 = vst [vmem:[#allocation11] sm:$0x3] %v1218
    // Predicated region
    $region54: #{tpu_custom_call.1} parent=1 // pred_check
      _
    $region55: #{tpu_custom_call.1} parent=1 // pred_check_branch
      %1223 = sbr.rel (0) target = $region57
    $region56: #{tpu_custom_call.1} parent=1 // pred_region
      %s1225 = ssub.s32 32, 32
      %1226 = vsyncadd [#allocation4], %s1225
      %s1228 = sshll.u32 [#allocation11], 4
      %s1229 = int_to_ptr.vmem [resolvable:$true] %s1228
      %1231 = dma.vmem_to_hbm [thread:$0]  %s1229, 32, %s8, [#allocation4]
    $region57: #{tpu_custom_call.1} parent=1 // pred_fallthru
      _
    // Predicated region
    $region58: #{tpu_custom_call.1} parent=1 // pred_check
      _
    $region59: #{tpu_custom_call.1} parent=1 // pred_check_branch
      %1233 = sbr.rel (0) target = $region61
    $region60: #{tpu_custom_call.1} parent=1 // pred_region
      %1234 = dma.done [#allocation4], 32
    $region61: #{tpu_custom_call.1} parent=1 // pred_fallthru
      _
    %1235 = vsyncpa [#allocation3], 1
    %1236 = vsyncpa [#allocation6], 1
    %1237 = vsyncpa [#allocation9], 1
    %1238 = vsyncpa [#allocation4], 1

</llo_original>
